<compile_context>
chip_gen: v7x
topology: tpu7x:2x2x1
jax: 0.10.0
libtpu: 0.0.40
codegen_flags: <defaults>
</compile_context>

<pallas_src>
import functools

import jax
import jax.numpy as jnp
from jax.experimental import pallas as pl
from jax.experimental.pallas import tpu as pltpu


def _round_up(x: int, m: int) -> int:
    return ((x + m - 1) // m) * m


def _mlp_sigm_kernel(x_ref, w1_ref, b1_ref, w2_ref, b2_ref, o_ref):
    # x_ref : (tm, Fp)   input tile (compute dtype)
    # w1_ref: (Fp, Hp)   fc1 weight, pre-transposed, contraction-major
    # b1_ref: (1, Hp)    fc1 bias
    # w2_ref: (Hp, Cp)   fc2 weight, pre-transposed, contraction-major
    # b2_ref: (1, Cp)    fc2 bias
    # o_ref : (tm, Cp)   output tile (f32)
    h = jnp.dot(x_ref[...], w1_ref[...], preferred_element_type=jnp.float32)
    # Sigmoid epilogue fused in-kernel (exp on EUP, add/select on VPU).
    h = jax.nn.sigmoid(h + b1_ref[...].astype(jnp.float32))

    out = jnp.dot(h.astype(w2_ref.dtype), w2_ref[...],
                  preferred_element_type=jnp.float32)
    o_ref[...] = (out + b2_ref[...].astype(jnp.float32)).astype(o_ref.dtype)


def prepare_weights(w1, b1, w2, b2, compute_dtype=jnp.float32):
    """One-time weight prep: pad to lane-dense multiples of 128, transpose to
    contraction-major layout, and (optionally) cast to the compute dtype.

    w1: (H, F) PyTorch nn.Linear layout, b1: (H,)
    w2: (C, H) PyTorch nn.Linear layout, b2: (C,)
    Returns (w1_t, b1_p, w2_t, b2_p):
      w1_t: (Fp, Hp), b1_p: (1, Hp), w2_t: (Hp, Cp), b2_p: (1, Cp)
    Zero padding is exact: padded F columns multiply zero x columns; padded
    hidden units give sigmoid(0)=0.5 but hit zero W2 rows; padded classes are
    sliced off.
    """
    H, F = w1.shape
    C = w2.shape[0]
    Fp = _round_up(F, 128)
    Hp = _round_up(H, 128)
    Cp = _round_up(C, 128)

    dt = compute_dtype
    w1_t = jnp.zeros((Fp, Hp), dt).at[:F, :H].set(w1.T.astype(dt))
    b1_p = jnp.zeros((1, Hp), dt).at[0, :H].set(b1.astype(dt))
    w2_t = jnp.zeros((Hp, Cp), dt).at[:H, :C].set(w2.T.astype(dt))
    b2_p = jnp.zeros((1, Cp), dt).at[0, :C].set(b2.astype(dt))
    return w1_t, b1_p, w2_t, b2_p


@functools.partial(jax.jit, static_argnames=("num_classes", "block_b"))
def red_neuronal_sigm_forward(x, w1_t, b1_p, w2_t, b2_p, *,
                              num_classes, block_b=256):
    """Fused forward pass. x: (B, F) f32; weights from prepare_weights."""
    B, F = x.shape
    Fp, Hp = w1_t.shape
    Cp = w2_t.shape[1]
    cdt = w1_t.dtype

    # Batch tile: multiple of 8 sublanes, capped at block_b.
    tm = min(block_b, _round_up(B, 8))
    Bp = _round_up(B, tm)

    # Per-call input prep: only x is padded / cast (weights were prepped once).
    if Bp == B and Fp == F and x.dtype == cdt:
        x_p = x
    else:
        x_p = jnp.zeros((Bp, Fp), cdt).at[:B, :F].set(x.astype(cdt))

    grid = (Bp // tm,)

    cost = pl.CostEstimate(
        flops=2 * Bp * (Fp * Hp + Hp * Cp),
        transcendentals=Bp * Hp,  # sigmoid exp
        bytes_accessed=(x_p.size * x_p.dtype.itemsize
                        + (w1_t.size + b1_p.size + w2_t.size + b2_p.size)
                        * cdt.itemsize
                        + Bp * Cp * 4),
    )

    # Explicit VMEM budget: double-buffered resident weights + streamed
    # x/out tiles + f32 intermediates + headroom.  Stays under v7x's 64 MiB
    # physical VMEM and above v5e's 16 MiB scoped default.
    isz = cdt.itemsize
    vmem_est = (2 * isz * (Fp * Hp + Hp + Hp * Cp + Cp)
                + 2 * isz * tm * Fp + 2 * 4 * tm * Cp
                + 4 * tm * Hp + 4 * tm * Cp
                + (4 << 20))
    vmem_limit = int(min(max(vmem_est, 24 << 20), 48 << 20))

    out_p = pl.pallas_call(
        _mlp_sigm_kernel,
        out_shape=jax.ShapeDtypeStruct((Bp, Cp), jnp.float32),
        grid_spec=pl.GridSpec(
            grid=grid,
            in_specs=[
                pl.BlockSpec((tm, Fp), lambda i: (i, 0)),   # x tile per batch block
                pl.BlockSpec((Fp, Hp), lambda i: (0, 0)),   # W1^T resident
                pl.BlockSpec((1, Hp), lambda i: (0, 0)),    # b1 resident
                pl.BlockSpec((Hp, Cp), lambda i: (0, 0)),   # W2^T resident
                pl.BlockSpec((1, Cp), lambda i: (0, 0)),    # b2 resident
            ],
            out_specs=pl.BlockSpec((tm, Cp), lambda i: (i, 0)),
        ),
        compiler_params=pltpu.CompilerParams(
            dimension_semantics=("parallel",),
            vmem_limit_bytes=vmem_limit,
        ),
        cost_estimate=cost,
    )(x_p, w1_t, b1_p, w2_t, b2_p)

    return out_p[:B, :num_classes]


if __name__ == "__main__":
    # Small shapes consistent with the module: fc1 -> hidden 500 -> fc2.
    batch, input_size, num_classes = 8, 32, 16
    hidden_size = 500

    key = jax.random.PRNGKey(0)
    kx, kw1, kb1, kw2, kb2 = jax.random.split(key, 5)

    # nn.Linear-style init: U(-1/sqrt(fan_in), 1/sqrt(fan_in))
    bound1 = 1.0 / (input_size ** 0.5)
    w1 = jax.random.uniform(kw1, (hidden_size, input_size), jnp.float32,
                            minval=-bound1, maxval=bound1)
    b1 = jax.random.uniform(kb1, (hidden_size,), jnp.float32,
                            minval=-bound1, maxval=bound1)
    bound2 = 1.0 / (hidden_size ** 0.5)
    w2 = jax.random.uniform(kw2, (num_classes, hidden_size), jnp.float32,
                            minval=-bound2, maxval=bound2)
    b2 = jax.random.uniform(kb2, (num_classes,), jnp.float32,
                            minval=-bound2, maxval=bound2)
    x = jax.random.normal(kx, (batch, input_size), jnp.float32)

    # One-time weight prep (f32 here for the exact reference check; pass
    # compute_dtype=jnp.bfloat16 on v6e/v7x for MXU-native feeds).
    w1_t, b1_p, w2_t, b2_p = prepare_weights(w1, b1, w2, b2,
                                             compute_dtype=jnp.float32)

    out = red_neuronal_sigm_forward(x, w1_t, b1_p, w2_t, b2_p,
                                    num_classes=num_classes)
    out = jax.block_until_ready(out)

    # Pure-JAX reference with identical semantics to the PyTorch module.
    h_ref = jax.nn.sigmoid(x @ w1.T + b1)
    ref = h_ref @ w2.T + b2

    assert out.shape == (batch, num_classes)
    assert jnp.allclose(out, ref, atol=1e-5, rtol=1e-5), (
        float(jnp.max(jnp.abs(out - ref))))

    print("KERNEL_OK")
</pallas_src>

<mosaic_0001>
module attributes {stable_mosaic.version = 11 : i64} {
  func.func @_mlp_sigm_kernel(%arg0: i32, %arg1: memref<8x128xf32, #tpu.memory_space<vmem>>, %arg2: memref<128x512xf32, #tpu.memory_space<vmem>>, %arg3: memref<1x512xf32, #tpu.memory_space<vmem>>, %arg4: memref<512x128xf32, #tpu.memory_space<vmem>>, %arg5: memref<1x128xf32, #tpu.memory_space<vmem>>, %arg6: memref<8x128xf32, #tpu.memory_space<vmem>>) attributes {dimension_semantics = [#tpu.dimension_semantics<parallel>], iteration_bounds = array<i64: 1>, scalar_prefetch = 0 : i64, scratch_operands = 0 : i64, tpu.core_type = #tpu.core_type<tc>, window_params = [{transform_indices = @transform_0, window_bounds = array<i64: 8, 128>}, {pipeline_mode = #tpu.pipeline_mode<synchronous>, transform_indices = @transform_1, window_bounds = array<i64: 128, 512>}, {pipeline_mode = #tpu.pipeline_mode<synchronous>, transform_indices = @transform_2, window_bounds = array<i64: 1, 512>}, {pipeline_mode = #tpu.pipeline_mode<synchronous>, transform_indices = @transform_3, window_bounds = array<i64: 512, 128>}, {pipeline_mode = #tpu.pipeline_mode<synchronous>, transform_indices = @transform_4, window_bounds = array<i64: 1, 128>}, {transform_indices = @transform_5, window_bounds = array<i64: 8, 128>}]} {
    %c0 = arith.constant 0 : index
    %c0_0 = arith.constant 0 : index
    %0 = vector.load %arg1[%c0, %c0_0] : memref<8x128xf32, #tpu.memory_space<vmem>>, vector<8x128xf32>
    %c0_1 = arith.constant 0 : index
    %c0_2 = arith.constant 0 : index
    %1 = vector.load %arg2[%c0_1, %c0_2] : memref<128x512xf32, #tpu.memory_space<vmem>>, vector<128x512xf32>
    %cst = arith.constant dense<0.000000e+00> : vector<8x512xf32>
    %2 = tpu.matmul %0, %1, %cst {dimension_numbers = #tpu.dot_dimension_numbers<[1], [0], [0], [1], [0, 0, 1, 1], [], []>} : vector<8x128xf32>, vector<128x512xf32>, vector<8x512xf32> -> vector<8x512xf32>
    %c0_3 = arith.constant 0 : index
    %c0_4 = arith.constant 0 : index
    %3 = vector.load %arg3[%c0_3, %c0_4] : memref<1x512xf32, #tpu.memory_space<vmem>>, vector<1x512xf32>
    %4 = vector.broadcast %3 : vector<1x512xf32> to vector<8x512xf32>
    %5 = arith.addf %2, %4 : vector<8x512xf32>
    %6 = arith.negf %5 : vector<8x512xf32>
    %7 = math.exp %6 : vector<8x512xf32>
    %cst_5 = arith.constant 1.000000e+00 : f32
    %8 = vector.broadcast %cst_5 : f32 to vector<8x512xf32>
    %9 = arith.addf %8, %7 : vector<8x512xf32>
    %10 = arith.divf %8, %9 : vector<8x512xf32>
    %c0_6 = arith.constant 0 : index
    %c0_7 = arith.constant 0 : index
    %11 = vector.load %arg4[%c0_6, %c0_7] : memref<512x128xf32, #tpu.memory_space<vmem>>, vector<512x128xf32>
    %cst_8 = arith.constant dense<0.000000e+00> : vector<8x128xf32>
    %12 = tpu.matmul %10, %11, %cst_8 {dimension_numbers = #tpu.dot_dimension_numbers<[1], [0], [0], [1], [0, 0, 1, 1], [], []>} : vector<8x512xf32>, vector<512x128xf32>, vector<8x128xf32> -> vector<8x128xf32>
    %c0_9 = arith.constant 0 : index
    %c0_10 = arith.constant 0 : index
    %13 = vector.load %arg5[%c0_9, %c0_10] : memref<1x128xf32, #tpu.memory_space<vmem>>, vector<1x128xf32>
    %14 = vector.broadcast %13 : vector<1x128xf32> to vector<8x128xf32>
    %15 = arith.addf %12, %14 : vector<8x128xf32>
    %c0_11 = arith.constant 0 : index
    %c0_12 = arith.constant 0 : index
    %16 = vector.load %arg6[%c0_11, %c0_12] : memref<8x128xf32, #tpu.memory_space<vmem>>, vector<8x128xf32>
    tpu.vector_store %arg6[%c0_11, %c0_12], %15 {strides = array<i32>} : memref<8x128xf32, #tpu.memory_space<vmem>>, vector<8x128xf32>,
    return
  }
  func.func @transform_0(%arg0: i32) -> (i32, i32) {
    %c0_i32 = arith.constant 0 : i32
    %c0_i32_0 = arith.constant 0 : i32
    return %arg0, %c0_i32 : i32, i32
  }
  func.func @transform_1(%arg0: i32) -> (i32, i32) {
    %c0_i32 = arith.constant 0 : i32
    %c0_i32_0 = arith.constant 0 : i32
    %c0_i32_1 = arith.constant 0 : i32
    return %c0_i32, %c0_i32_0 : i32, i32
  }
  func.func @transform_2(%arg0: i32) -> (i32, i32) {
    %c0_i32 = arith.constant 0 : i32
    %c0_i32_0 = arith.constant 0 : i32
    %c0_i32_1 = arith.constant 0 : i32
    return %c0_i32, %c0_i32_0 : i32, i32
  }
  func.func @transform_3(%arg0: i32) -> (i32, i32) {
    %c0_i32 = arith.constant 0 : i32
    %c0_i32_0 = arith.constant 0 : i32
    %c0_i32_1 = arith.constant 0 : i32
    return %c0_i32, %c0_i32_0 : i32, i32
  }
  func.func @transform_4(%arg0: i32) -> (i32, i32) {
    %c0_i32 = arith.constant 0 : i32
    %c0_i32_0 = arith.constant 0 : i32
    %c0_i32_1 = arith.constant 0 : i32
    return %c0_i32, %c0_i32_0 : i32, i32
  }
  func.func @transform_5(%arg0: i32) -> (i32, i32) {
    %c0_i32 = arith.constant 0 : i32
    %c0_i32_0 = arith.constant 0 : i32
    return %arg0, %c0_i32 : i32, i32
  }
}

</mosaic_0001>

<llo_original>
// kernel: red_neuronal_sigm_forward.1
$region0: #{red_neuronal_sigm_forward.1}
  #allocation0 [shape = 'u32[]', space=smem, size = 0x4, offset = 0x4, fixed_abs, tag = 'smem constant byte address 0x4 - core index']
  #allocation1 [shape = 'u32[144,128]{1,0:T(1,128)}', space=vmem, size = 0x12000, scoped, tag = 'internal scratch']
  %s0 = inlined_call_operand.vmem [shape: f32[8,128], index: 0, kind: input, shape index: {}]
  %s1 = inlined_call_operand.hbm [shape: f32[128,512], index: 1, kind: input, shape index: {}]
  %s2 = inlined_call_operand.vmem [shape: f32[1,512], index: 2, kind: input, shape index: {}]
  %s3 = inlined_call_operand.hbm [shape: f32[512,128], index: 3, kind: input, shape index: {}]
  %s4 = inlined_call_operand.vmem [shape: f32[1,128], index: 4, kind: input, shape index: {}]
  %s5 = inlined_call_operand.hbm [shape: f32[8,128], index: 5, kind: output, shape index: {}]
  %s6 = sld [smem:[#allocation0]]
  $region38: #{red_neuronal_sigm_forward.1} parent=0
    _
  %s8 = ssub.s32 1, %s6
  %s9 = scalar_select 0, %s8, %s6
  $region1: #{red_neuronal_sigm_forward.1} parent=0
    #allocation2 [shape = 'u8[262144]{0}', space=vmem, size = 0x40000, scoped, tag = 'input window, operand 1, single buffered']
    #allocation3 [shape = 's32[1]{0}', space=sflag, size = 0x4, scoped, tag = 'scoped memory for red_neuronal_sigm_forward.1']
    #allocation4 [shape = 's32[1]{0}', space=sflag, size = 0x4, scoped, tag = 'scoped memory for red_neuronal_sigm_forward.1']
    #allocation5 [shape = 'u8[262144]{0}', space=vmem, size = 0x40000, scoped, tag = 'input window, operand 3, single buffered']
    #allocation6 [shape = 's32[1]{0}', space=sflag, size = 0x4, scoped, tag = 'scoped memory for red_neuronal_sigm_forward.1']
    #allocation7 [shape = 'u8[4096]{0}', space=vmem, size = 0x1000, scoped, tag = 'output window, operand 0, single buffered']
    %10 = vsyncpa [#allocation3], 0
    %11 = vsyncpa [#allocation6], 0
    %12 = vsyncpa [#allocation4], 0
    // Predicated region
    $region2: #{red_neuronal_sigm_forward.1} parent=1 // pred_check
      _
    $region3: #{red_neuronal_sigm_forward.1} parent=1 // pred_check_branch
      %14 = sbr.rel (0) target = $region5
    $region4: #{red_neuronal_sigm_forward.1} parent=1 // pred_region
      _
    $region5: #{red_neuronal_sigm_forward.1} parent=1 // pred_fallthru
      _
    // Predicated region
    $region6: #{red_neuronal_sigm_forward.1} parent=1 // pred_check
      _
    $region7: #{red_neuronal_sigm_forward.1} parent=1 // pred_check_branch
      %16 = sbr.rel (0) target = $region9
    $region8: #{red_neuronal_sigm_forward.1} parent=1 // pred_region
      %s18 = ssub.s32 8192, 8192
      %19 = vsyncadd [#allocation3], %s18
      %s20 = sshll.u32 [#allocation2], 4
      %s21 = int_to_ptr.vmem [resolvable:$true] %s20
      %26 = dma.hbm_to_vmem [thread:$0]  %s1, 8192, %s21, [#allocation3], 512, 512, 32
    $region9: #{red_neuronal_sigm_forward.1} parent=1 // pred_fallthru
      _
    // Predicated region
    $region10: #{red_neuronal_sigm_forward.1} parent=1 // pred_check
      _
    $region11: #{red_neuronal_sigm_forward.1} parent=1 // pred_check_branch
      %28 = sbr.rel (0) target = $region13
    $region12: #{red_neuronal_sigm_forward.1} parent=1 // pred_region
      _
    $region13: #{red_neuronal_sigm_forward.1} parent=1 // pred_fallthru
      _
    // Predicated region
    $region14: #{red_neuronal_sigm_forward.1} parent=1 // pred_check
      _
    $region15: #{red_neuronal_sigm_forward.1} parent=1 // pred_check_branch
      %30 = sbr.rel (0) target = $region17
    $region16: #{red_neuronal_sigm_forward.1} parent=1 // pred_region
      %s32 = ssub.s32 8192, 8192
      %33 = vsyncadd [#allocation6], %s32
      %s34 = sshll.u32 [#allocation5], 4
      %s35 = int_to_ptr.vmem [resolvable:$true] %s34
      %40 = dma.hbm_to_vmem [thread:$0]  %s3, 8192, %s35, [#allocation6], 128, 128, 8
    $region17: #{red_neuronal_sigm_forward.1} parent=1 // pred_fallthru
      _
    // Predicated region
    $region18: #{red_neuronal_sigm_forward.1} parent=1 // pred_check
      _
    $region19: #{red_neuronal_sigm_forward.1} parent=1 // pred_check_branch
      %42 = sbr.rel (0) target = $region21
    $region20: #{red_neuronal_sigm_forward.1} parent=1 // pred_region
      _
    $region21: #{red_neuronal_sigm_forward.1} parent=1 // pred_fallthru
      _
    // Predicated region
    $region22: #{red_neuronal_sigm_forward.1} parent=1 // pred_check
      _
    $region23: #{red_neuronal_sigm_forward.1} parent=1 // pred_check_branch
      %44 = sbr.rel (0) target = $region25
    $region24: #{red_neuronal_sigm_forward.1} parent=1 // pred_region
      %45 = dma.done [#allocation3], 8192
    $region25: #{red_neuronal_sigm_forward.1} parent=1 // pred_fallthru
      _
    // Predicated region
    $region26: #{red_neuronal_sigm_forward.1} parent=1 // pred_check
      _
    $region27: #{red_neuronal_sigm_forward.1} parent=1 // pred_check_branch
      %47 = sbr.rel (0) target = $region29
    $region28: #{red_neuronal_sigm_forward.1} parent=1 // pred_region
      %48 = dma.done [#allocation6], 8192
    $region29: #{red_neuronal_sigm_forward.1} parent=1 // pred_fallthru
      _
    %v49 = vld [vmem:[%s0] sm:$0xff]
    %v50 = vld [vmem:[#allocation2] sm:$0xff]
    %v51 = vld [vmem:[#allocation2 + $0x8] sm:$0xff]
    %v52 = vld [vmem:[#allocation2 + $0x10] sm:$0xff]
    %v53 = vld [vmem:[#allocation2 + $0x18] sm:$0xff]
    %v54 = vld [vmem:[#allocation2 + $0x20] sm:$0xff]
    %v55 = vld [vmem:[#allocation2 + $0x28] sm:$0xff]
    %v56 = vld [vmem:[#allocation2 + $0x30] sm:$0xff]
    %v57 = vld [vmem:[#allocation2 + $0x38] sm:$0xff]
    %v58 = vld [vmem:[#allocation2 + $0x40] sm:$0xff]
    %v59 = vld [vmem:[#allocation2 + $0x48] sm:$0xff]
    %v60 = vld [vmem:[#allocation2 + $0x50] sm:$0xff]
    %v61 = vld [vmem:[#allocation2 + $0x58] sm:$0xff]
    %v62 = vld [vmem:[#allocation2 + $0x60] sm:$0xff]
    %v63 = vld [vmem:[#allocation2 + $0x68] sm:$0xff]
    %v64 = vld [vmem:[#allocation2 + $0x70] sm:$0xff]
    %v65 = vld [vmem:[#allocation2 + $0x78] sm:$0xff]
    %v66 = vld [vmem:[#allocation2 + $0x80] sm:$0xff]
    %v67 = vld [vmem:[#allocation2 + $0x88] sm:$0xff]
    %v68 = vld [vmem:[#allocation2 + $0x90] sm:$0xff]
    %v69 = vld [vmem:[#allocation2 + $0x98] sm:$0xff]
    %v70 = vld [vmem:[#allocation2 + $0xa0] sm:$0xff]
    %v71 = vld [vmem:[#allocation2 + $0xa8] sm:$0xff]
    %v72 = vld [vmem:[#allocation2 + $0xb0] sm:$0xff]
    %v73 = vld [vmem:[#allocation2 + $0xb8] sm:$0xff]
    %v74 = vld [vmem:[#allocation2 + $0xc0] sm:$0xff]
    %v75 = vld [vmem:[#allocation2 + $0xc8] sm:$0xff]
    %v76 = vld [vmem:[#allocation2 + $0xd0] sm:$0xff]
    %v77 = vld [vmem:[#allocation2 + $0xd8] sm:$0xff]
    %v78 = vld [vmem:[#allocation2 + $0xe0] sm:$0xff]
    %v79 = vld [vmem:[#allocation2 + $0xe8] sm:$0xff]
    %v80 = vld [vmem:[#allocation2 + $0xf0] sm:$0xff]
    %v81 = vld [vmem:[#allocation2 + $0xf8] sm:$0xff]
    %v82 = vld [vmem:[#allocation2 + $0x100] sm:$0xff]
    %v83 = vld [vmem:[#allocation2 + $0x108] sm:$0xff]
    %v84 = vld [vmem:[#allocation2 + $0x110] sm:$0xff]
    %v85 = vld [vmem:[#allocation2 + $0x118] sm:$0xff]
    %v86 = vld [vmem:[#allocation2 + $0x120] sm:$0xff]
    %v87 = vld [vmem:[#allocation2 + $0x128] sm:$0xff]
    %v88 = vld [vmem:[#allocation2 + $0x130] sm:$0xff]
    %v89 = vld [vmem:[#allocation2 + $0x138] sm:$0xff]
    %v90 = vld [vmem:[#allocation2 + $0x140] sm:$0xff]
    %v91 = vld [vmem:[#allocation2 + $0x148] sm:$0xff]
    %v92 = vld [vmem:[#allocation2 + $0x150] sm:$0xff]
    %v93 = vld [vmem:[#allocation2 + $0x158] sm:$0xff]
    %v94 = vld [vmem:[#allocation2 + $0x160] sm:$0xff]
    %v95 = vld [vmem:[#allocation2 + $0x168] sm:$0xff]
    %v96 = vld [vmem:[#allocation2 + $0x170] sm:$0xff]
    %v97 = vld [vmem:[#allocation2 + $0x178] sm:$0xff]
    %v98 = vld [vmem:[#allocation2 + $0x180] sm:$0xff]
    %v99 = vld [vmem:[#allocation2 + $0x188] sm:$0xff]
    %v100 = vld [vmem:[#allocation2 + $0x190] sm:$0xff]
    %v101 = vld [vmem:[#allocation2 + $0x198] sm:$0xff]
    %v102 = vld [vmem:[#allocation2 + $0x1a0] sm:$0xff]
    %v103 = vld [vmem:[#allocation2 + $0x1a8] sm:$0xff]
    %v104 = vld [vmem:[#allocation2 + $0x1b0] sm:$0xff]
    %v105 = vld [vmem:[#allocation2 + $0x1b8] sm:$0xff]
    %v106 = vld [vmem:[#allocation2 + $0x1c0] sm:$0xff]
    %v107 = vld [vmem:[#allocation2 + $0x1c8] sm:$0xff]
    %v108 = vld [vmem:[#allocation2 + $0x1d0] sm:$0xff]
    %v109 = vld [vmem:[#allocation2 + $0x1d8] sm:$0xff]
    %v110 = vld [vmem:[#allocation2 + $0x1e0] sm:$0xff]
    %v111 = vld [vmem:[#allocation2 + $0x1e8] sm:$0xff]
    %v112 = vld [vmem:[#allocation2 + $0x1f0] sm:$0xff]
    %v113 = vld [vmem:[#allocation2 + $0x1f8] sm:$0xff]
    %v114 = vld [vmem:[%s2] sm:$0xf]
    %v116 = vlaneseq
    %v117 = vshrl.u32 %v116, 7
    %v118 = vsub.s32 0, %v117
    %v119 = vrot.slane %v114, %v118
    %v120 = vlaneseq
    %v121 = vshrl.u32 %v120, 7
    %v122 = vsub.s32 1, %v121
    %v123 = vrot.slane %v114, %v122
    %v124 = vlaneseq
    %v125 = vshrl.u32 %v124, 7
    %v126 = vsub.s32 2, %v125
    %v127 = vrot.slane %v114, %v126
    %v128 = vlaneseq
    %v129 = vshrl.u32 %v128, 7
    %v130 = vsub.s32 3, %v129
    %v131 = vrot.slane %v114, %v130
    %136 = vmatprep.subr.mxu0 %v51
    %137 = vmatpush1.msra.mxu0 %v50
    %138 = vmatprep.subr.mxu0 %v55
    %139 = vmatpush1.msra.mxu0 %v54
    %140 = vmatprep.subr.mxu0 %v59
    %141 = vmatpush1.msra.mxu0 %v58
    %142 = vmatprep.subr.mxu0 %v63
    %143 = vmatpush1.msra.mxu0 %v62
    %144 = vmatprep.subr.mxu0 %v67
    %145 = vmatpush1.msra.mxu0 %v66
    %146 = vmatprep.subr.mxu0 %v71
    %147 = vmatpush1.msra.mxu0 %v70
    %148 = vmatprep.subr.mxu0 %v75
    %149 = vmatpush1.msra.mxu0 %v74
    %150 = vmatprep.subr.mxu0 %v79
    %151 = vmatpush1.msra.mxu0 %v78
    %152 = vmatprep.subr.mxu0 %v83
    %153 = vmatpush1.msra.mxu0 %v82
    %154 = vmatprep.subr.mxu0 %v87
    %155 = vmatpush1.msra.mxu0 %v86
    %156 = vmatprep.subr.mxu0 %v91
    %157 = vmatpush1.msra.mxu0 %v90
    %158 = vmatprep.subr.mxu0 %v95
    %159 = vmatpush1.msra.mxu0 %v94
    %160 = vmatprep.subr.mxu0 %v99
    %161 = vmatpush1.msra.mxu0 %v98
    %162 = vmatprep.subr.mxu0 %v103
    %163 = vmatpush1.msra.mxu0 %v102
    %164 = vmatprep.subr.mxu0 %v107
    %165 = vmatpush1.msra.mxu0 %v106
    %166 = vmatprep.subr.mxu0 %v111
    %167 = vmatpush1.msra.mxu0 %v110
    %168 = vmatprep.subr.mxu0 0.0
    %169 = vmatpush1.msra.mxu0 0.0
    %170 = vmatprep.subr.mxu0 0.0
    %171 = vmatpush1.msra.mxu0 0.0
    %172 = vmatprep.subr.mxu0 0.0
    %173 = vmatpush1.msra.mxu0 0.0
    %174 = vmatprep.subr.mxu0 0.0
    %175 = vmatpush1.msra.mxu0 0.0
    %176 = vmatprep.subr.mxu0 0.0
    %177 = vmatpush1.msra.mxu0 0.0
    %178 = vmatprep.subr.mxu0 0.0
    %179 = vmatpush1.msra.mxu0 0.0
    %180 = vmatprep.subr.mxu0 0.0
    %181 = vmatpush1.msra.mxu0 0.0
    %182 = vmatprep.subr.mxu0 0.0
    %183 = vmatpush1.msra.mxu0 0.0
    %184 = vmatprep.subr.mxu0 0.0
    %185 = vmatpush1.msra.mxu0 0.0
    %186 = vmatprep.subr.mxu0 0.0
    %187 = vmatpush1.msra.mxu0 0.0
    %188 = vmatprep.subr.mxu0 0.0
    %189 = vmatpush1.msra.mxu0 0.0
    %190 = vmatprep.subr.mxu0 0.0
    %191 = vmatpush1.msra.mxu0 0.0
    %192 = vmatprep.subr.mxu0 0.0
    %193 = vmatpush1.msra.mxu0 0.0
    %194 = vmatprep.subr.mxu0 0.0
    %195 = vmatpush1.msra.mxu0 0.0
    %196 = vmatprep.subr.mxu0 0.0
    %197 = vmatpush1.msra.mxu0 0.0
    %198 = vmatprep.subr.mxu0 0.0
    %199 = vmatpush1.msra.mxu0 0.0
    %200 = vmatprep.mubr.f32.mxu0 0.0
    %201 = vmatmul.mubr.f32.gmra.mrb[0].mxu0 %v49
    %v202 = vpop.f32.mrb[0].mxu0
    %v203 = vadd.f32 %v119, %v202
    %v204 = vpop.f32.mrb[0].mxu0
    %v205 = vadd.f32 %v123, %v204
    %206 = vdwg.mxu0
    %207 = vmatprep.subr.mxu0 %v53
    %208 = vmatpush1.msra.mxu0 %v52
    %209 = vmatprep.subr.mxu0 %v57
    %210 = vmatpush1.msra.mxu0 %v56
    %211 = vmatprep.subr.mxu0 %v61
    %212 = vmatpush1.msra.mxu0 %v60
    %213 = vmatprep.subr.mxu0 %v65
    %214 = vmatpush1.msra.mxu0 %v64
    %215 = vmatprep.subr.mxu0 %v69
    %216 = vmatpush1.msra.mxu0 %v68
    %217 = vmatprep.subr.mxu0 %v73
    %218 = vmatpush1.msra.mxu0 %v72
    %219 = vmatprep.subr.mxu0 %v77
    %220 = vmatpush1.msra.mxu0 %v76
    %221 = vmatprep.subr.mxu0 %v81
    %222 = vmatpush1.msra.mxu0 %v80
    %223 = vmatprep.subr.mxu0 %v85
    %224 = vmatpush1.msra.mxu0 %v84
    %225 = vmatprep.subr.mxu0 %v89
    %226 = vmatpush1.msra.mxu0 %v88
    %227 = vmatprep.subr.mxu0 %v93
    %228 = vmatpush1.msra.mxu0 %v92
    %229 = vmatprep.subr.mxu0 %v97
    %230 = vmatpush1.msra.mxu0 %v96
    %231 = vmatprep.subr.mxu0 %v101
    %232 = vmatpush1.msra.mxu0 %v100
    %233 = vmatprep.subr.mxu0 %v105
    %234 = vmatpush1.msra.mxu0 %v104
    %235 = vmatprep.subr.mxu0 %v109
    %236 = vmatpush1.msra.mxu0 %v108
    %237 = vmatprep.subr.mxu0 %v113
    %238 = vmatpush1.msra.mxu0 %v112
    %239 = vmatprep.subr.mxu0 0.0
    %240 = vmatpush1.msra.mxu0 0.0
    %241 = vmatprep.subr.mxu0 0.0
    %242 = vmatpush1.msra.mxu0 0.0
    %243 = vmatprep.subr.mxu0 0.0
    %244 = vmatpush1.msra.mxu0 0.0
    %245 = vmatprep.subr.mxu0 0.0
    %246 = vmatpush1.msra.mxu0 0.0
    %247 = vmatprep.subr.mxu0 0.0
    %248 = vmatpush1.msra.mxu0 0.0
    %249 = vmatprep.subr.mxu0 0.0
    %250 = vmatpush1.msra.mxu0 0.0
    %251 = vmatprep.subr.mxu0 0.0
    %252 = vmatpush1.msra.mxu0 0.0
    %253 = vmatprep.subr.mxu0 0.0
    %254 = vmatpush1.msra.mxu0 0.0
    %255 = vmatprep.subr.mxu0 0.0
    %256 = vmatpush1.msra.mxu0 0.0
    %257 = vmatprep.subr.mxu0 0.0
    %258 = vmatpush1.msra.mxu0 0.0
    %259 = vmatprep.subr.mxu0 0.0
    %260 = vmatpush1.msra.mxu0 0.0
    %261 = vmatprep.subr.mxu0 0.0
    %262 = vmatpush1.msra.mxu0 0.0
    %263 = vmatprep.subr.mxu0 0.0
    %264 = vmatpush1.msra.mxu0 0.0
    %265 = vmatprep.subr.mxu0 0.0
    %266 = vmatpush1.msra.mxu0 0.0
    %267 = vmatprep.subr.mxu0 0.0
    %268 = vmatpush1.msra.mxu0 0.0
    %269 = vmatprep.subr.mxu0 0.0
    %270 = vmatpush1.msra.mxu0 0.0
    %271 = vmatprep.mubr.f32.mxu0 0.0
    %272 = vmatmul.mubr.f32.gmra.mrb[0].mxu0 %v49
    %v273 = vpop.f32.mrb[0].mxu0
    %v274 = vadd.f32 %v127, %v273
    %v275 = vpop.f32.mrb[0].mxu0
    %v276 = vadd.f32 %v131, %v275
    %277 = vdwg.mxu0
    %v278 = vxor.u32 %v203, 2147483648
    %v279 = vxor.u32 %v205, 2147483648
    %v280 = vxor.u32 %v274, 2147483648
    %v281 = vxor.u32 %v276, 2147483648
    %v282 = vmul.f32 %v278, 1.442695
    %v283 = vpow.pop %v282
    %v284 = vmul.f32 %v279, 1.442695
    %v285 = vpow.pop %v284
    %v286 = vmul.f32 %v280, 1.442695
    %v287 = vpow.pop %v286
    %v288 = vmul.f32 %v281, 1.442695
    %v289 = vpow.pop %v288
    %v290 = vadd.f32 %v283, 1.0
    %v291 = vadd.f32 %v285, 1.0
    %v292 = vadd.f32 %v287, 1.0
    %v293 = vadd.f32 %v289, 1.0
    %v294 = vrcp.pop %v290
    %v295 = vmul.f32 1.0, %v294
    %v296 = vrcp.pop %v291
    %v297 = vmul.f32 1.0, %v296
    %v298 = vrcp.pop %v292
    %v299 = vmul.f32 1.0, %v298
    %v300 = vrcp.pop %v293
    %v301 = vmul.f32 1.0, %v300
    %v302 = vld [vmem:[#allocation5] sm:$0xff]
    %v303 = vld [vmem:[#allocation5 + $0x8] sm:$0xff]
    %v304 = vld [vmem:[#allocation5 + $0x10] sm:$0xff]
    %v305 = vld [vmem:[#allocation5 + $0x18] sm:$0xff]
    %v306 = vld [vmem:[#allocation5 + $0x20] sm:$0xff]
    %v307 = vld [vmem:[#allocation5 + $0x28] sm:$0xff]
    %v308 = vld [vmem:[#allocation5 + $0x30] sm:$0xff]
    %v309 = vld [vmem:[#allocation5 + $0x38] sm:$0xff]
    %v310 = vld [vmem:[#allocation5 + $0x40] sm:$0xff]
    %v311 = vld [vmem:[#allocation5 + $0x48] sm:$0xff]
    %v312 = vld [vmem:[#allocation5 + $0x50] sm:$0xff]
    %v313 = vld [vmem:[#allocation5 + $0x58] sm:$0xff]
    %v314 = vld [vmem:[#allocation5 + $0x60] sm:$0xff]
    %v315 = vld [vmem:[#allocation5 + $0x68] sm:$0xff]
    %v316 = vld [vmem:[#allocation5 + $0x70] sm:$0xff]
    %v317 = vld [vmem:[#allocation5 + $0x78] sm:$0xff]
    %v318 = vld [vmem:[#allocation5 + $0x80] sm:$0xff]
    %v319 = vld [vmem:[#allocation5 + $0x88] sm:$0xff]
    %v320 = vld [vmem:[#allocation5 + $0x90] sm:$0xff]
    %v321 = vld [vmem:[#allocation5 + $0x98] sm:$0xff]
    %v322 = vld [vmem:[#allocation5 + $0xa0] sm:$0xff]
    %v323 = vld [vmem:[#allocation5 + $0xa8] sm:$0xff]
    %v324 = vld [vmem:[#allocation5 + $0xb0] sm:$0xff]
    %v325 = vld [vmem:[#allocation5 + $0xb8] sm:$0xff]
    %v326 = vld [vmem:[#allocation5 + $0xc0] sm:$0xff]
    %v327 = vld [vmem:[#allocation5 + $0xc8] sm:$0xff]
    %v328 = vld [vmem:[#allocation5 + $0xd0] sm:$0xff]
    %v329 = vld [vmem:[#allocation5 + $0xd8] sm:$0xff]
    %v330 = vld [vmem:[#allocation5 + $0xe0] sm:$0xff]
    %v331 = vld [vmem:[#allocation5 + $0xe8] sm:$0xff]
    %v332 = vld [vmem:[#allocation5 + $0xf0] sm:$0xff]
    %v333 = vld [vmem:[#allocation5 + $0xf8] sm:$0xff]
    %v334 = vld [vmem:[#allocation5 + $0x100] sm:$0xff]
    %v335 = vld [vmem:[#allocation5 + $0x108] sm:$0xff]
    %v336 = vld [vmem:[#allocation5 + $0x110] sm:$0xff]
    %v337 = vld [vmem:[#allocation5 + $0x118] sm:$0xff]
    %v338 = vld [vmem:[#allocation5 + $0x120] sm:$0xff]
    %v339 = vld [vmem:[#allocation5 + $0x128] sm:$0xff]
    %v340 = vld [vmem:[#allocation5 + $0x130] sm:$0xff]
    %v341 = vld [vmem:[#allocation5 + $0x138] sm:$0xff]
    %v342 = vld [vmem:[#allocation5 + $0x140] sm:$0xff]
    %v343 = vld [vmem:[#allocation5 + $0x148] sm:$0xff]
    %v344 = vld [vmem:[#allocation5 + $0x150] sm:$0xff]
    %v345 = vld [vmem:[#allocation5 + $0x158] sm:$0xff]
    %v346 = vld [vmem:[#allocation5 + $0x160] sm:$0xff]
    %v347 = vld [vmem:[#allocation5 + $0x168] sm:$0xff]
    %v348 = vld [vmem:[#allocation5 + $0x170] sm:$0xff]
    %v349 = vld [vmem:[#allocation5 + $0x178] sm:$0xff]
    %v350 = vld [vmem:[#allocation5 + $0x180] sm:$0xff]
    %v351 = vld [vmem:[#allocation5 + $0x188] sm:$0xff]
    %v352 = vld [vmem:[#allocation5 + $0x190] sm:$0xff]
    %v353 = vld [vmem:[#allocation5 + $0x198] sm:$0xff]
    %v354 = vld [vmem:[#allocation5 + $0x1a0] sm:$0xff]
    %v355 = vld [vmem:[#allocation5 + $0x1a8] sm:$0xff]
    %v356 = vld [vmem:[#allocation5 + $0x1b0] sm:$0xff]
    %v357 = vld [vmem:[#allocation5 + $0x1b8] sm:$0xff]
    %v358 = vld [vmem:[#allocation5 + $0x1c0] sm:$0xff]
    %v359 = vld [vmem:[#allocation5 + $0x1c8] sm:$0xff]
    %v360 = vld [vmem:[#allocation5 + $0x1d0] sm:$0xff]
    %v361 = vld [vmem:[#allocation5 + $0x1d8] sm:$0xff]
    %v362 = vld [vmem:[#allocation5 + $0x1e0] sm:$0xff]
    %v363 = vld [vmem:[#allocation5 + $0x1e8] sm:$0xff]
    %v364 = vld [vmem:[#allocation5 + $0x1f0] sm:$0xff]
    %v365 = vld [vmem:[#allocation5 + $0x1f8] sm:$0xff]
    %v366 = vld [vmem:[%s4] sm:$0x1]
    %v368 = vlaneseq
    %v369 = vshrl.u32 %v368, 7
    %v370 = vsub.s32 0, %v369
    %v371 = vrot.slane %v366, %v370
    %373 = vmatprep.subr.mxu0 0.0
    %374 = vmatpush1.msra.mxu0 %v302
    %375 = vmatprep.subr.mxu0 0.0
    %376 = vmatpush1.msra.mxu0 %v303
    %377 = vmatprep.subr.mxu0 0.0
    %378 = vmatpush1.msra.mxu0 %v304
    %379 = vmatprep.subr.mxu0 0.0
    %380 = vmatpush1.msra.mxu0 %v305
    %381 = vmatprep.subr.mxu0 0.0
    %382 = vmatpush1.msra.mxu0 %v306
    %383 = vmatprep.subr.mxu0 0.0
    %384 = vmatpush1.msra.mxu0 %v307
    %385 = vmatprep.subr.mxu0 0.0
    %386 = vmatpush1.msra.mxu0 %v308
    %387 = vmatprep.subr.mxu0 0.0
    %388 = vmatpush1.msra.mxu0 %v309
    %389 = vmatprep.subr.mxu0 0.0
    %390 = vmatpush1.msra.mxu0 %v310
    %391 = vmatprep.subr.mxu0 0.0
    %392 = vmatpush1.msra.mxu0 %v311
    %393 = vmatprep.subr.mxu0 0.0
    %394 = vmatpush1.msra.mxu0 %v312
    %395 = vmatprep.subr.mxu0 0.0
    %396 = vmatpush1.msra.mxu0 %v313
    %397 = vmatprep.subr.mxu0 0.0
    %398 = vmatpush1.msra.mxu0 %v314
    %399 = vmatprep.subr.mxu0 0.0
    %400 = vmatpush1.msra.mxu0 %v315
    %401 = vmatprep.subr.mxu0 0.0
    %402 = vmatpush1.msra.mxu0 %v316
    %403 = vmatprep.subr.mxu0 0.0
    %404 = vmatpush1.msra.mxu0 %v317
    %405 = vmatprep.subr.mxu0 0.0
    %406 = vmatpush1.msra.mxu0 %v318
    %407 = vmatprep.subr.mxu0 0.0
    %408 = vmatpush1.msra.mxu0 %v319
    %409 = vmatprep.subr.mxu0 0.0
    %410 = vmatpush1.msra.mxu0 %v320
    %411 = vmatprep.subr.mxu0 0.0
    %412 = vmatpush1.msra.mxu0 %v321
    %413 = vmatprep.subr.mxu0 0.0
    %414 = vmatpush1.msra.mxu0 %v322
    %415 = vmatprep.subr.mxu0 0.0
    %416 = vmatpush1.msra.mxu0 %v323
    %417 = vmatprep.subr.mxu0 0.0
    %418 = vmatpush1.msra.mxu0 %v324
    %419 = vmatprep.subr.mxu0 0.0
    %420 = vmatpush1.msra.mxu0 %v325
    %421 = vmatprep.subr.mxu0 0.0
    %422 = vmatpush1.msra.mxu0 %v326
    %423 = vmatprep.subr.mxu0 0.0
    %424 = vmatpush1.msra.mxu0 %v327
    %425 = vmatprep.subr.mxu0 0.0
    %426 = vmatpush1.msra.mxu0 %v328
    %427 = vmatprep.subr.mxu0 0.0
    %428 = vmatpush1.msra.mxu0 %v329
    %429 = vmatprep.subr.mxu0 0.0
    %430 = vmatpush1.msra.mxu0 %v330
    %431 = vmatprep.subr.mxu0 0.0
    %432 = vmatpush1.msra.mxu0 %v331
    %433 = vmatprep.subr.mxu0 0.0
    %434 = vmatpush1.msra.mxu0 %v332
    %435 = vmatprep.subr.mxu0 0.0
    %436 = vmatpush1.msra.mxu0 %v333
    %437 = vmatprep.mubr.f32.mxu0 %v297
    %438 = vmatmul.mubr.f32.gmra.mrb[0].mxu0 %v295
    %v439 = vpop.f32.mrb[0].mxu0
    %v440 = vadd.f32 %v371, %v439
    %v441 = vpop.f32.mrb[0].mxu0
    %442 = vdwg.mxu0
    %443 = vmatprep.subr.mxu0 0.0
    %444 = vmatpush1.msra.mxu0 %v334
    %445 = vmatprep.subr.mxu0 0.0
    %446 = vmatpush1.msra.mxu0 %v335
    %447 = vmatprep.subr.mxu0 0.0
    %448 = vmatpush1.msra.mxu0 %v336
    %449 = vmatprep.subr.mxu0 0.0
    %450 = vmatpush1.msra.mxu0 %v337
    %451 = vmatprep.subr.mxu0 0.0
    %452 = vmatpush1.msra.mxu0 %v338
    %453 = vmatprep.subr.mxu0 0.0
    %454 = vmatpush1.msra.mxu0 %v339
    %455 = vmatprep.subr.mxu0 0.0
    %456 = vmatpush1.msra.mxu0 %v340
    %457 = vmatprep.subr.mxu0 0.0
    %458 = vmatpush1.msra.mxu0 %v341
    %459 = vmatprep.subr.mxu0 0.0
    %460 = vmatpush1.msra.mxu0 %v342
    %461 = vmatprep.subr.mxu0 0.0
    %462 = vmatpush1.msra.mxu0 %v343
    %463 = vmatprep.subr.mxu0 0.0
    %464 = vmatpush1.msra.mxu0 %v344
    %465 = vmatprep.subr.mxu0 0.0
    %466 = vmatpush1.msra.mxu0 %v345
    %467 = vmatprep.subr.mxu0 0.0
    %468 = vmatpush1.msra.mxu0 %v346
    %469 = vmatprep.subr.mxu0 0.0
    %470 = vmatpush1.msra.mxu0 %v347
    %471 = vmatprep.subr.mxu0 0.0
    %472 = vmatpush1.msra.mxu0 %v348
    %473 = vmatprep.subr.mxu0 0.0
    %474 = vmatpush1.msra.mxu0 %v349
    %475 = vmatprep.subr.mxu0 0.0
    %476 = vmatpush1.msra.mxu0 %v350
    %477 = vmatprep.subr.mxu0 0.0
    %478 = vmatpush1.msra.mxu0 %v351
    %479 = vmatprep.subr.mxu0 0.0
    %480 = vmatpush1.msra.mxu0 %v352
    %481 = vmatprep.subr.mxu0 0.0
    %482 = vmatpush1.msra.mxu0 %v353
    %483 = vmatprep.subr.mxu0 0.0
    %484 = vmatpush1.msra.mxu0 %v354
    %485 = vmatprep.subr.mxu0 0.0
    %486 = vmatpush1.msra.mxu0 %v355
    %487 = vmatprep.subr.mxu0 0.0
    %488 = vmatpush1.msra.mxu0 %v356
    %489 = vmatprep.subr.mxu0 0.0
    %490 = vmatpush1.msra.mxu0 %v357
    %491 = vmatprep.subr.mxu0 0.0
    %492 = vmatpush1.msra.mxu0 %v358
    %493 = vmatprep.subr.mxu0 0.0
    %494 = vmatpush1.msra.mxu0 %v359
    %495 = vmatprep.subr.mxu0 0.0
    %496 = vmatpush1.msra.mxu0 %v360
    %497 = vmatprep.subr.mxu0 0.0
    %498 = vmatpush1.msra.mxu0 %v361
    %499 = vmatprep.subr.mxu0 0.0
    %500 = vmatpush1.msra.mxu0 %v362
    %501 = vmatprep.subr.mxu0 0.0
    %502 = vmatpush1.msra.mxu0 %v363
    %503 = vmatprep.subr.mxu0 0.0
    %504 = vmatpush1.msra.mxu0 %v364
    %505 = vmatprep.subr.mxu0 0.0
    %506 = vmatpush1.msra.mxu0 %v365
    %507 = vmatprep.mubr.f32.mxu0 %v301
    %508 = vmatmul.mubr.f32.gmra.mrb[0].mxu0 %v299
    %v509 = vpop.f32.mrb[0].mxu0
    %v510 = vadd.f32 %v440, %v509
    %v511 = vpop.f32.mrb[0].mxu0
    %512 = vdwg.mxu0
    %513 = vst [vmem:[#allocation7] sm:$0xff] %v510
    // Predicated region
    $region30: #{red_neuronal_sigm_forward.1} parent=1 // pred_check
      _
    $region31: #{red_neuronal_sigm_forward.1} parent=1 // pred_check_branch
      %515 = sbr.rel (0) target = $region33
    $region32: #{red_neuronal_sigm_forward.1} parent=1 // pred_region
      %s517 = ssub.s32 128, 128
      %518 = vsyncadd [#allocation4], %s517
      %s520 = sshll.u32 [#allocation7], 4
      %s521 = int_to_ptr.vmem [resolvable:$true] %s520
      %523 = dma.vmem_to_hbm [thread:$0]  %s521, 128, %s5, [#allocation4]
    $region33: #{red_neuronal_sigm_forward.1} parent=1 // pred_fallthru
      _
    // Predicated region
    $region34: #{red_neuronal_sigm_forward.1} parent=1 // pred_check
      _
    $region35: #{red_neuronal_sigm_forward.1} parent=1 // pred_check_branch
      %525 = sbr.rel (0) target = $region37
    $region36: #{red_neuronal_sigm_forward.1} parent=1 // pred_region
      %526 = dma.done [#allocation4], 128
    $region37: #{red_neuronal_sigm_forward.1} parent=1 // pred_fallthru
      _
    %527 = vsyncpa [#allocation3], 1
    %528 = vsyncpa [#allocation6], 1
    %529 = vsyncpa [#allocation4], 1

</llo_original>
